<compile_context>
chip_gen: v5e
topology: v5e:2x2
jax: 0.10.0
libtpu: 0.0.40
codegen_flags: <defaults>
</compile_context>

<pallas_src>
import functools

import jax
import jax.numpy as jnp
from jax.experimental import pallas as pl
from jax.experimental.pallas import tpu as pltpu

HIDDEN = 256
TB_MAX = 512          # batch-tile rows (multiple of 256: fills v6e/v7x MXU M-dim)
LANE = 128            # lane width: pad fc3 output columns to a multiple of this


def _round_up(n, m):
    return (n + m - 1) // m * m


def qnet_kernel(x_ref, w1_ref, b1_ref, w2_ref, b2_ref, w3_ref, b3_ref, out_ref):
    # x tile: (TB, in_size) bf16; weights resident in VMEM (constant index_map).
    x = x_ref[...]

    # fc1 + relu (bf16 matmul, f32 accumulate)
    h1 = jnp.dot(x, w1_ref[...], preferred_element_type=jnp.float32) + b1_ref[...]
    h1 = jnp.maximum(h1, 0.0).astype(jnp.bfloat16)

    # fc2 + relu
    h2 = jnp.dot(h1, w2_ref[...], preferred_element_type=jnp.float32) + b2_ref[...]
    h2 = jnp.maximum(h2, 0.0).astype(jnp.bfloat16)

    # fc3 (no activation), lane-dense (TB, 128*k) store
    out = jnp.dot(h2, w3_ref[...], preferred_element_type=jnp.float32) + b3_ref[...]
    out_ref[...] = out.astype(out_ref.dtype)


@jax.jit
def qnetwork_forward(x, w1, b1, w2, b2, w3, b3):
    """x: (B, in). Weights stored as (in_features, out_features); biases (1, out)."""
    B, in_size = x.shape
    out_size = w3.shape[1]
    out_pad = max(LANE, _round_up(out_size, LANE))

    # Batch tiling: pad B to a multiple of the tile (>= 8 sublanes).
    tb = min(TB_MAX, _round_up(B, 8))
    b_pad = _round_up(B, tb)

    # bf16 weights/activations for the MXU; zero-pad fc3 columns to lane width.
    xb = jnp.zeros((b_pad, in_size), jnp.bfloat16).at[:B].set(x.astype(jnp.bfloat16))
    w1b = w1.astype(jnp.bfloat16)
    w2b = w2.astype(jnp.bfloat16)
    w3b = jnp.zeros((HIDDEN, out_pad), jnp.bfloat16).at[:, :out_size].set(
        w3.astype(jnp.bfloat16))
    b3p = jnp.zeros((1, out_pad), jnp.float32).at[:, :out_size].set(b3)

    grid = (b_pad // tb,)
    const = lambda shape: pl.BlockSpec(shape, lambda i: (0, 0))

    out = pl.pallas_call(
        qnet_kernel,
        out_shape=jax.ShapeDtypeStruct((b_pad, out_pad), jnp.float32),
        grid=grid,
        in_specs=[
            pl.BlockSpec((tb, in_size), lambda i: (i, 0)),     # x tile
            const((in_size, HIDDEN)),                           # w1 (resident)
            const((1, HIDDEN)),                                 # b1
            const((HIDDEN, HIDDEN)),                            # w2
            const((1, HIDDEN)),                                 # b2
            const((HIDDEN, out_pad)),                           # w3 (padded)
            const((1, out_pad)),                                # b3 (padded)
        ],
        out_specs=pl.BlockSpec((tb, out_pad), lambda i: (i, 0)),
        compiler_params=pltpu.CompilerParams(
            dimension_semantics=("parallel",),
        ),
    )(xb, w1b, b1, w2b, b2, w3b, b3p)

    return out[:B, :out_size]


def init_linear_params(key, in_features, out_features):
    # Mimics PyTorch nn.Linear default init: U(-1/sqrt(fan_in), 1/sqrt(fan_in)).
    kw, kb = jax.random.split(key)
    bound = 1.0 / jnp.sqrt(jnp.float32(in_features))
    w = jax.random.uniform(kw, (in_features, out_features), jnp.float32, -bound, bound)
    b = jax.random.uniform(kb, (1, out_features), jnp.float32, -bound, bound)
    return w, b


def reference_forward(x, w1, b1, w2, b2, w3, b3):
    h1 = jnp.maximum(x @ w1 + b1, 0.0)
    h2 = jnp.maximum(h1 @ w2 + b2, 0.0)
    return h2 @ w3 + b3


if __name__ == "__main__":
    input_size = 16
    output_size = 4
    batch = 8

    key = jax.random.PRNGKey(0)
    kx, k1, k2, k3 = jax.random.split(key, 4)

    x = jax.random.normal(kx, (batch, input_size), jnp.float32)
    w1, b1 = init_linear_params(k1, input_size, HIDDEN)
    w2, b2 = init_linear_params(k2, HIDDEN, HIDDEN)
    w3, b3 = init_linear_params(k3, HIDDEN, output_size)

    out = qnetwork_forward(x, w1, b1, w2, b2, w3, b3)
    out = jax.block_until_ready(out)

    ref = reference_forward(x, w1, b1, w2, b2, w3, b3)
    assert out.shape == (batch, output_size)
    # bf16 weights/activations on the MXU -> relax tolerance vs f32 reference.
    assert jnp.allclose(out, ref, atol=3e-2, rtol=3e-2), "mismatch vs JAX reference"

    print("KERNEL_OK")
</pallas_src>

<mosaic_0001>
module attributes {stable_mosaic.version = 11 : i64} {
  func.func @qnet_kernel(%arg0: i32, %arg1: memref<8x16xbf16, #tpu.memory_space<vmem>>, %arg2: memref<16x256xbf16, #tpu.memory_space<vmem>>, %arg3: memref<1x256xf32, #tpu.memory_space<vmem>>, %arg4: memref<256x256xbf16, #tpu.memory_space<vmem>>, %arg5: memref<1x256xf32, #tpu.memory_space<vmem>>, %arg6: memref<256x128xbf16, #tpu.memory_space<vmem>>, %arg7: memref<1x128xf32, #tpu.memory_space<vmem>>, %arg8: memref<8x128xf32, #tpu.memory_space<vmem>>) attributes {dimension_semantics = [#tpu.dimension_semantics<parallel>], iteration_bounds = array<i64: 1>, scalar_prefetch = 0 : i64, scratch_operands = 0 : i64, tpu.core_type = #tpu.core_type<tc>, window_params = [{transform_indices = @transform_0, window_bounds = array<i64: 8, 16>}, {pipeline_mode = #tpu.pipeline_mode<synchronous>, transform_indices = @transform_1, window_bounds = array<i64: 16, 256>}, {pipeline_mode = #tpu.pipeline_mode<synchronous>, transform_indices = @transform_2, window_bounds = array<i64: 1, 256>}, {pipeline_mode = #tpu.pipeline_mode<synchronous>, transform_indices = @transform_3, window_bounds = array<i64: 256, 256>}, {pipeline_mode = #tpu.pipeline_mode<synchronous>, transform_indices = @transform_4, window_bounds = array<i64: 1, 256>}, {pipeline_mode = #tpu.pipeline_mode<synchronous>, transform_indices = @transform_5, window_bounds = array<i64: 256, 128>}, {pipeline_mode = #tpu.pipeline_mode<synchronous>, transform_indices = @transform_6, window_bounds = array<i64: 1, 128>}, {transform_indices = @transform_7, window_bounds = array<i64: 8, 128>}]} {
    %c0 = arith.constant 0 : index
    %c0_0 = arith.constant 0 : index
    %0 = vector.load %arg1[%c0, %c0_0] : memref<8x16xbf16, #tpu.memory_space<vmem>>, vector<8x16xbf16>
    %c0_1 = arith.constant 0 : index
    %c0_2 = arith.constant 0 : index
    %1 = vector.load %arg2[%c0_1, %c0_2] : memref<16x256xbf16, #tpu.memory_space<vmem>>, vector<16x256xbf16>
    %cst = arith.constant dense<0.000000e+00> : vector<8x256xf32>
    %2 = tpu.matmul %0, %1, %cst {dimension_numbers = #tpu.dot_dimension_numbers<[1], [0], [0], [1], [0, 0, 1, 1], [], []>} : vector<8x16xbf16>, vector<16x256xbf16>, vector<8x256xf32> -> vector<8x256xf32>
    %c0_3 = arith.constant 0 : index
    %c0_4 = arith.constant 0 : index
    %3 = vector.load %arg3[%c0_3, %c0_4] : memref<1x256xf32, #tpu.memory_space<vmem>>, vector<1x256xf32>
    %4 = vector.broadcast %3 : vector<1x256xf32> to vector<8x256xf32>
    %5 = arith.addf %2, %4 : vector<8x256xf32>
    %cst_5 = arith.constant 0.000000e+00 : f32
    %6 = vector.broadcast %cst_5 : f32 to vector<8x256xf32>
    %7 = arith.maximumf %5, %6 : vector<8x256xf32>
    %8 = arith.truncf %7 : vector<8x256xf32> to vector<8x256xbf16>
    %c0_6 = arith.constant 0 : index
    %c0_7 = arith.constant 0 : index
    %9 = vector.load %arg4[%c0_6, %c0_7] : memref<256x256xbf16, #tpu.memory_space<vmem>>, vector<256x256xbf16>
    %cst_8 = arith.constant dense<0.000000e+00> : vector<8x256xf32>
    %10 = tpu.matmul %8, %9, %cst_8 {dimension_numbers = #tpu.dot_dimension_numbers<[1], [0], [0], [1], [0, 0, 1, 1], [], []>} : vector<8x256xbf16>, vector<256x256xbf16>, vector<8x256xf32> -> vector<8x256xf32>
    %c0_9 = arith.constant 0 : index
    %c0_10 = arith.constant 0 : index
    %11 = vector.load %arg5[%c0_9, %c0_10] : memref<1x256xf32, #tpu.memory_space<vmem>>, vector<1x256xf32>
    %12 = vector.broadcast %11 : vector<1x256xf32> to vector<8x256xf32>
    %13 = arith.addf %10, %12 : vector<8x256xf32>
    %cst_11 = arith.constant 0.000000e+00 : f32
    %14 = vector.broadcast %cst_11 : f32 to vector<8x256xf32>
    %15 = arith.maximumf %13, %14 : vector<8x256xf32>
    %16 = arith.truncf %15 : vector<8x256xf32> to vector<8x256xbf16>
    %c0_12 = arith.constant 0 : index
    %c0_13 = arith.constant 0 : index
    %17 = vector.load %arg6[%c0_12, %c0_13] : memref<256x128xbf16, #tpu.memory_space<vmem>>, vector<256x128xbf16>
    %cst_14 = arith.constant dense<0.000000e+00> : vector<8x128xf32>
    %18 = tpu.matmul %16, %17, %cst_14 {dimension_numbers = #tpu.dot_dimension_numbers<[1], [0], [0], [1], [0, 0, 1, 1], [], []>} : vector<8x256xbf16>, vector<256x128xbf16>, vector<8x128xf32> -> vector<8x128xf32>
    %c0_15 = arith.constant 0 : index
    %c0_16 = arith.constant 0 : index
    %19 = vector.load %arg7[%c0_15, %c0_16] : memref<1x128xf32, #tpu.memory_space<vmem>>, vector<1x128xf32>
    %20 = vector.broadcast %19 : vector<1x128xf32> to vector<8x128xf32>
    %21 = arith.addf %18, %20 : vector<8x128xf32>
    %c0_17 = arith.constant 0 : index
    %c0_18 = arith.constant 0 : index
    %22 = vector.load %arg8[%c0_17, %c0_18] : memref<8x128xf32, #tpu.memory_space<vmem>>, vector<8x128xf32>
    tpu.vector_store %arg8[%c0_17, %c0_18], %21 {strides = array<i32>} : memref<8x128xf32, #tpu.memory_space<vmem>>, vector<8x128xf32>,
    return
  }
  func.func @transform_0(%arg0: i32) -> (i32, i32) {
    %c0_i32 = arith.constant 0 : i32
    %c0_i32_0 = arith.constant 0 : i32
    return %arg0, %c0_i32 : i32, i32
  }
  func.func @transform_1(%arg0: i32) -> (i32, i32) {
    %c0_i32 = arith.constant 0 : i32
    %c0_i32_0 = arith.constant 0 : i32
    %c0_i32_1 = arith.constant 0 : i32
    return %c0_i32, %c0_i32_0 : i32, i32
  }
  func.func @transform_2(%arg0: i32) -> (i32, i32) {
    %c0_i32 = arith.constant 0 : i32
    %c0_i32_0 = arith.constant 0 : i32
    %c0_i32_1 = arith.constant 0 : i32
    return %c0_i32, %c0_i32_0 : i32, i32
  }
  func.func @transform_3(%arg0: i32) -> (i32, i32) {
    %c0_i32 = arith.constant 0 : i32
    %c0_i32_0 = arith.constant 0 : i32
    %c0_i32_1 = arith.constant 0 : i32
    return %c0_i32, %c0_i32_0 : i32, i32
  }
  func.func @transform_4(%arg0: i32) -> (i32, i32) {
    %c0_i32 = arith.constant 0 : i32
    %c0_i32_0 = arith.constant 0 : i32
    %c0_i32_1 = arith.constant 0 : i32
    return %c0_i32, %c0_i32_0 : i32, i32
  }
  func.func @transform_5(%arg0: i32) -> (i32, i32) {
    %c0_i32 = arith.constant 0 : i32
    %c0_i32_0 = arith.constant 0 : i32
    %c0_i32_1 = arith.constant 0 : i32
    return %c0_i32, %c0_i32_0 : i32, i32
  }
  func.func @transform_6(%arg0: i32) -> (i32, i32) {
    %c0_i32 = arith.constant 0 : i32
    %c0_i32_0 = arith.constant 0 : i32
    %c0_i32_1 = arith.constant 0 : i32
    return %c0_i32, %c0_i32_0 : i32, i32
  }
  func.func @transform_7(%arg0: i32) -> (i32, i32) {
    %c0_i32 = arith.constant 0 : i32
    %c0_i32_0 = arith.constant 0 : i32
    return %arg0, %c0_i32 : i32, i32
  }
}

</mosaic_0001>

<llo_original>
// kernel: qnetwork_forward.1
$region0: #{qnetwork_forward.1}
  #allocation0 [shape = 'u32[]', space=smem, size = 0x4, offset = 0x4, fixed_abs, tag = 'smem constant byte address 0x4 - core index']
  #allocation1 [shape = 'u32[72,128]{1,0:T(1,128)}', space=vmem, size = 0x9000, scoped, tag = 'internal scratch']
  %s0 = inlined_call_operand.vmem [shape: bf16[8,16], index: 0, kind: input, shape index: {}]
  %s1 = inlined_call_operand.vmem [shape: bf16[16,256], index: 1, kind: input, shape index: {}]
  %s2 = inlined_call_operand.vmem [shape: f32[1,256], index: 2, kind: input, shape index: {}]
  %s3 = inlined_call_operand.vmem [shape: bf16[256,256], index: 3, kind: input, shape index: {}]
  %s4 = inlined_call_operand.vmem [shape: f32[1,256], index: 4, kind: input, shape index: {}]
  %s5 = inlined_call_operand.vmem [shape: bf16[256,128], index: 5, kind: input, shape index: {}]
  %s6 = inlined_call_operand.vmem [shape: f32[1,128], index: 6, kind: input, shape index: {}]
  %s7 = inlined_call_operand.vmem [shape: f32[8,128], index: 7, kind: output, shape index: {}]
  %s8 = sld [smem:[#allocation0]]
  $region38: #{qnetwork_forward.1} parent=0
    _
  %s10 = ssub.s32 1, %s8
  %s11 = scalar_select 0, %s10, %s8
  // Predicated region
  $region2: #{qnetwork_forward.1} parent=0 // pred_check
    _
  $region3: #{qnetwork_forward.1} parent=0 // pred_check_branch
    %13 = sbr.rel (0) target = $region5
  $region4: #{qnetwork_forward.1} parent=0 // pred_region
    _
  $region5: #{qnetwork_forward.1} parent=0 // pred_fallthru
    _
  // Predicated region
  $region6: #{qnetwork_forward.1} parent=0 // pred_check
    _
  $region7: #{qnetwork_forward.1} parent=0 // pred_check_branch
    %15 = sbr.rel (0) target = $region9
  $region8: #{qnetwork_forward.1} parent=0 // pred_region
    _
  $region9: #{qnetwork_forward.1} parent=0 // pred_fallthru
    _
  // Predicated region
  $region10: #{qnetwork_forward.1} parent=0 // pred_check
    _
  $region11: #{qnetwork_forward.1} parent=0 // pred_check_branch
    %17 = sbr.rel (0) target = $region13
  $region12: #{qnetwork_forward.1} parent=0 // pred_region
    _
  $region13: #{qnetwork_forward.1} parent=0 // pred_fallthru
    _
  // Predicated region
  $region14: #{qnetwork_forward.1} parent=0 // pred_check
    _
  $region15: #{qnetwork_forward.1} parent=0 // pred_check_branch
    %19 = sbr.rel (0) target = $region17
  $region16: #{qnetwork_forward.1} parent=0 // pred_region
    _
  $region17: #{qnetwork_forward.1} parent=0 // pred_fallthru
    _
  // Predicated region
  $region18: #{qnetwork_forward.1} parent=0 // pred_check
    _
  $region19: #{qnetwork_forward.1} parent=0 // pred_check_branch
    %21 = sbr.rel (0) target = $region21
  $region20: #{qnetwork_forward.1} parent=0 // pred_region
    _
  $region21: #{qnetwork_forward.1} parent=0 // pred_fallthru
    _
  // Predicated region
  $region22: #{qnetwork_forward.1} parent=0 // pred_check
    _
  $region23: #{qnetwork_forward.1} parent=0 // pred_check_branch
    %23 = sbr.rel (0) target = $region25
  $region24: #{qnetwork_forward.1} parent=0 // pred_region
    _
  $region25: #{qnetwork_forward.1} parent=0 // pred_fallthru
    _
  // Predicated region
  $region26: #{qnetwork_forward.1} parent=0 // pred_check
    _
  $region27: #{qnetwork_forward.1} parent=0 // pred_check_branch
    %25 = sbr.rel (0) target = $region29
  $region28: #{qnetwork_forward.1} parent=0 // pred_region
    _
  $region29: #{qnetwork_forward.1} parent=0 // pred_fallthru
    _
  %v27 = vld [vmem:[%s0] sm:$0xf]
  %v28 = vld [vmem:[%s1] sm:$0xff]
  %v29 = vld [vmem:[%s1 + $0x8] sm:$0xff]
  %v30 = vld [vmem:[%s2] sm:$0x3]
  %v32 = vperm.slane %v30, 0
  %v33 = vperm.slane %v30, 1
  %v38 = vunpack.c.l.b16 %v28
  %v39 = vunpack.c.h.b16 %v28
  %v40 = vunpack.c.l.b16 %v29
  %v41 = vunpack.c.h.b16 %v29
  %v42 = vpack.c.b16 %v40, %v38
  %v43 = vpack.c.b16 %v41, %v39
  %vm46 = vcmask 130048
  %v48 = vsel %vm46, %v27, 0
  %50 = vmatpush.bf16.msra.mxu0 0
  %51 = vmatpush.bf16.msra.mxu0 0
  %52 = vmatpush.bf16.msra.mxu0 0
  %53 = vmatpush.bf16.msra.mxu0 0
  %54 = vmatpush.bf16.msra.mxu0 0
  %55 = vmatpush.bf16.msra.mxu0 0
  %56 = vmatpush.bf16.msra.mxu0 0
  %57 = vmatpush.bf16.msra.mxu0 %v42
  %58 = vmatmul.bf16.gmra.mxu0 %v48
  %v59 = vpop.f32.mrf.mxu0
  %v60 = vadd.f32 %v32, %v59
  %v61 = vpop.f32.mrf.mxu0
  %62 = vdwg.mxu0
  %63 = vmatpush.bf16.msra.mxu0 0
  %64 = vmatpush.bf16.msra.mxu0 0
  %65 = vmatpush.bf16.msra.mxu0 0
  %66 = vmatpush.bf16.msra.mxu0 0
  %67 = vmatpush.bf16.msra.mxu0 0
  %68 = vmatpush.bf16.msra.mxu0 0
  %69 = vmatpush.bf16.msra.mxu0 0
  %70 = vmatpush.bf16.msra.mxu0 %v43
  %71 = vmatmul.bf16.gmra.mxu0 %v48
  %v72 = vpop.f32.mrf.mxu0
  %v73 = vadd.f32 %v33, %v72
  %v74 = vpop.f32.mrf.mxu0
  %75 = vdwg.mxu0
  %v76 = vmax.f32 %v60, 0.0
  %v77 = vmax.f32 %v73, 0.0
  %v78 = vpack.c.bf16 %v76, %v76
  %v79 = vpack.c.bf16 %v77, %v77
  %v80 = vld [vmem:[%s3] sm:$0xff]
  %v81 = vld [vmem:[%s3 + $0x8] sm:$0xff]
  %v82 = vld [vmem:[%s3 + $0x10] sm:$0xff]
  %v83 = vld [vmem:[%s3 + $0x18] sm:$0xff]
  %v84 = vld [vmem:[%s3 + $0x20] sm:$0xff]
  %v85 = vld [vmem:[%s3 + $0x28] sm:$0xff]
  %v86 = vld [vmem:[%s3 + $0x30] sm:$0xff]
  %v87 = vld [vmem:[%s3 + $0x38] sm:$0xff]
  %v88 = vld [vmem:[%s3 + $0x40] sm:$0xff]
  %v89 = vld [vmem:[%s3 + $0x48] sm:$0xff]
  %v90 = vld [vmem:[%s3 + $0x50] sm:$0xff]
  %v91 = vld [vmem:[%s3 + $0x58] sm:$0xff]
  %v92 = vld [vmem:[%s3 + $0x60] sm:$0xff]
  %v93 = vld [vmem:[%s3 + $0x68] sm:$0xff]
  %v94 = vld [vmem:[%s3 + $0x70] sm:$0xff]
  %v95 = vld [vmem:[%s3 + $0x78] sm:$0xff]
  %v96 = vld [vmem:[%s3 + $0x80] sm:$0xff]
  %v97 = vld [vmem:[%s3 + $0x88] sm:$0xff]
  %v98 = vld [vmem:[%s3 + $0x90] sm:$0xff]
  %v99 = vld [vmem:[%s3 + $0x98] sm:$0xff]
  %v100 = vld [vmem:[%s3 + $0xa0] sm:$0xff]
  %v101 = vld [vmem:[%s3 + $0xa8] sm:$0xff]
  %v102 = vld [vmem:[%s3 + $0xb0] sm:$0xff]
  %v103 = vld [vmem:[%s3 + $0xb8] sm:$0xff]
  %v104 = vld [vmem:[%s3 + $0xc0] sm:$0xff]
  %v105 = vld [vmem:[%s3 + $0xc8] sm:$0xff]
  %v106 = vld [vmem:[%s3 + $0xd0] sm:$0xff]
  %v107 = vld [vmem:[%s3 + $0xd8] sm:$0xff]
  %v108 = vld [vmem:[%s3 + $0xe0] sm:$0xff]
  %v109 = vld [vmem:[%s3 + $0xe8] sm:$0xff]
  %v110 = vld [vmem:[%s3 + $0xf0] sm:$0xff]
  %v111 = vld [vmem:[%s3 + $0xf8] sm:$0xff]
  %v112 = vld [vmem:[%s4] sm:$0x3]
  %v114 = vperm.slane %v112, 0
  %v115 = vperm.slane %v112, 1
  %v150 = vunpack.c.l.b16 %v80
  %v151 = vunpack.c.h.b16 %v80
  %v152 = vunpack.c.l.b16 %v81
  %v153 = vunpack.c.h.b16 %v81
  %v154 = vunpack.c.l.b16 %v82
  %v155 = vunpack.c.h.b16 %v82
  %v156 = vunpack.c.l.b16 %v83
  %v157 = vunpack.c.h.b16 %v83
  %v158 = vunpack.c.l.b16 %v84
  %v159 = vunpack.c.h.b16 %v84
  %v160 = vunpack.c.l.b16 %v85
  %v161 = vunpack.c.h.b16 %v85
  %v162 = vunpack.c.l.b16 %v86
  %v163 = vunpack.c.h.b16 %v86
  %v164 = vunpack.c.l.b16 %v87
  %v165 = vunpack.c.h.b16 %v87
  %v166 = vunpack.c.l.b16 %v88
  %v167 = vunpack.c.h.b16 %v88
  %v168 = vunpack.c.l.b16 %v89
  %v169 = vunpack.c.h.b16 %v89
  %v170 = vunpack.c.l.b16 %v90
  %v171 = vunpack.c.h.b16 %v90
  %v172 = vunpack.c.l.b16 %v91
  %v173 = vunpack.c.h.b16 %v91
  %v174 = vunpack.c.l.b16 %v92
  %v175 = vunpack.c.h.b16 %v92
  %v176 = vunpack.c.l.b16 %v93
  %v177 = vunpack.c.h.b16 %v93
  %v178 = vunpack.c.l.b16 %v94
  %v179 = vunpack.c.h.b16 %v94
  %v180 = vunpack.c.l.b16 %v95
  %v181 = vunpack.c.h.b16 %v95
  %v182 = vunpack.c.l.b16 %v96
  %v183 = vunpack.c.h.b16 %v96
  %v184 = vunpack.c.l.b16 %v97
  %v185 = vunpack.c.h.b16 %v97
  %v186 = vunpack.c.l.b16 %v98
  %v187 = vunpack.c.h.b16 %v98
  %v188 = vunpack.c.l.b16 %v99
  %v189 = vunpack.c.h.b16 %v99
  %v190 = vunpack.c.l.b16 %v100
  %v191 = vunpack.c.h.b16 %v100
  %v192 = vunpack.c.l.b16 %v101
  %v193 = vunpack.c.h.b16 %v101
  %v194 = vunpack.c.l.b16 %v102
  %v195 = vunpack.c.h.b16 %v102
  %v196 = vunpack.c.l.b16 %v103
  %v197 = vunpack.c.h.b16 %v103
  %v198 = vunpack.c.l.b16 %v104
  %v199 = vunpack.c.h.b16 %v104
  %v200 = vunpack.c.l.b16 %v105
  %v201 = vunpack.c.h.b16 %v105
  %v202 = vunpack.c.l.b16 %v106
  %v203 = vunpack.c.h.b16 %v106
  %v204 = vunpack.c.l.b16 %v107
  %v205 = vunpack.c.h.b16 %v107
  %v206 = vunpack.c.l.b16 %v108
  %v207 = vunpack.c.h.b16 %v108
  %v208 = vunpack.c.l.b16 %v109
  %v209 = vunpack.c.h.b16 %v109
  %v210 = vunpack.c.l.b16 %v110
  %v211 = vunpack.c.h.b16 %v110
  %v212 = vunpack.c.l.b16 %v111
  %v213 = vunpack.c.h.b16 %v111
  %v214 = vpack.c.b16 %v152, %v150
  %v215 = vpack.c.b16 %v153, %v151
  %v216 = vpack.c.b16 %v156, %v154
  %v217 = vpack.c.b16 %v157, %v155
  %v218 = vpack.c.b16 %v160, %v158
  %v219 = vpack.c.b16 %v161, %v159
  %v220 = vpack.c.b16 %v164, %v162
  %v221 = vpack.c.b16 %v165, %v163
  %v222 = vpack.c.b16 %v168, %v166
  %v223 = vpack.c.b16 %v169, %v167
  %v224 = vpack.c.b16 %v172, %v170
  %v225 = vpack.c.b16 %v173, %v171
  %v226 = vpack.c.b16 %v176, %v174
  %v227 = vpack.c.b16 %v177, %v175
  %v228 = vpack.c.b16 %v180, %v178
  %v229 = vpack.c.b16 %v181, %v179
  %v230 = vpack.c.b16 %v184, %v182
  %v231 = vpack.c.b16 %v185, %v183
  %v232 = vpack.c.b16 %v188, %v186
  %v233 = vpack.c.b16 %v189, %v187
  %v234 = vpack.c.b16 %v192, %v190
  %v235 = vpack.c.b16 %v193, %v191
  %v236 = vpack.c.b16 %v196, %v194
  %v237 = vpack.c.b16 %v197, %v195
  %v238 = vpack.c.b16 %v200, %v198
  %v239 = vpack.c.b16 %v201, %v199
  %v240 = vpack.c.b16 %v204, %v202
  %v241 = vpack.c.b16 %v205, %v203
  %v242 = vpack.c.b16 %v208, %v206
  %v243 = vpack.c.b16 %v209, %v207
  %v244 = vpack.c.b16 %v212, %v210
  %v245 = vpack.c.b16 %v213, %v211
  %278 = vmatpush.bf16.msra.mxu0 %v228
  %279 = vmatpush.bf16.msra.mxu0 %v226
  %280 = vmatpush.bf16.msra.mxu0 %v224
  %281 = vmatpush.bf16.msra.mxu0 %v222
  %282 = vmatpush.bf16.msra.mxu0 %v220
  %283 = vmatpush.bf16.msra.mxu0 %v218
  %284 = vmatpush.bf16.msra.mxu0 %v216
  %285 = vmatpush.bf16.msra.mxu0 %v214
  %286 = vmatmul.bf16.gmra.mxu0 %v78
  %v287 = vpop.f32.mrf.mxu0
  %v288 = vadd.f32 %v114, %v287
  %v289 = vpop.f32.mrf.mxu0
  %290 = vdwg.mxu0
  %291 = vmatpush.bf16.msra.mxu0 %v244
  %292 = vmatpush.bf16.msra.mxu0 %v242
  %293 = vmatpush.bf16.msra.mxu0 %v240
  %294 = vmatpush.bf16.msra.mxu0 %v238
  %295 = vmatpush.bf16.msra.mxu0 %v236
  %296 = vmatpush.bf16.msra.mxu0 %v234
  %297 = vmatpush.bf16.msra.mxu0 %v232
  %298 = vmatpush.bf16.msra.mxu0 %v230
  %299 = vmatmul.bf16.gmra.mxu0 %v79
  %v300 = vpop.f32.mrf.mxu0
  %v301 = vadd.f32 %v288, %v300
  %v302 = vpop.f32.mrf.mxu0
  %303 = vdwg.mxu0
  %304 = vmatpush.bf16.msra.mxu0 %v229
  %305 = vmatpush.bf16.msra.mxu0 %v227
  %306 = vmatpush.bf16.msra.mxu0 %v225
  %307 = vmatpush.bf16.msra.mxu0 %v223
  %308 = vmatpush.bf16.msra.mxu0 %v221
  %309 = vmatpush.bf16.msra.mxu0 %v219
  %310 = vmatpush.bf16.msra.mxu0 %v217
  %311 = vmatpush.bf16.msra.mxu0 %v215
  %312 = vmatmul.bf16.gmra.mxu0 %v78
  %v313 = vpop.f32.mrf.mxu0
  %v314 = vadd.f32 %v115, %v313
  %v315 = vpop.f32.mrf.mxu0
  %316 = vdwg.mxu0
  %317 = vmatpush.bf16.msra.mxu0 %v245
  %318 = vmatpush.bf16.msra.mxu0 %v243
  %319 = vmatpush.bf16.msra.mxu0 %v241
  %320 = vmatpush.bf16.msra.mxu0 %v239
  %321 = vmatpush.bf16.msra.mxu0 %v237
  %322 = vmatpush.bf16.msra.mxu0 %v235
  %323 = vmatpush.bf16.msra.mxu0 %v233
  %324 = vmatpush.bf16.msra.mxu0 %v231
  %325 = vmatmul.bf16.gmra.mxu0 %v79
  %v326 = vpop.f32.mrf.mxu0
  %v327 = vadd.f32 %v314, %v326
  %v328 = vpop.f32.mrf.mxu0
  %329 = vdwg.mxu0
  %v330 = vmax.f32 %v301, 0.0
  %v331 = vmax.f32 %v327, 0.0
  %v332 = vpack.c.bf16 %v330, %v330
  %v333 = vpack.c.bf16 %v331, %v331
  %v334 = vld [vmem:[%s5] sm:$0xf]
  %v335 = vld [vmem:[%s5 + $0x4] sm:$0xf]
  %v336 = vld [vmem:[%s5 + $0x8] sm:$0xf]
  %v337 = vld [vmem:[%s5 + $0xc] sm:$0xf]
  %v338 = vld [vmem:[%s5 + $0x10] sm:$0xf]
  %v339 = vld [vmem:[%s5 + $0x14] sm:$0xf]
  %v340 = vld [vmem:[%s5 + $0x18] sm:$0xf]
  %v341 = vld [vmem:[%s5 + $0x1c] sm:$0xf]
  %v342 = vld [vmem:[%s5 + $0x20] sm:$0xf]
  %v343 = vld [vmem:[%s5 + $0x24] sm:$0xf]
  %v344 = vld [vmem:[%s5 + $0x28] sm:$0xf]
  %v345 = vld [vmem:[%s5 + $0x2c] sm:$0xf]
  %v346 = vld [vmem:[%s5 + $0x30] sm:$0xf]
  %v347 = vld [vmem:[%s5 + $0x34] sm:$0xf]
  %v348 = vld [vmem:[%s5 + $0x38] sm:$0xf]
  %v349 = vld [vmem:[%s5 + $0x3c] sm:$0xf]
  %v350 = vld [vmem:[%s5 + $0x40] sm:$0xf]
  %v351 = vld [vmem:[%s5 + $0x44] sm:$0xf]
  %v352 = vld [vmem:[%s5 + $0x48] sm:$0xf]
  %v353 = vld [vmem:[%s5 + $0x4c] sm:$0xf]
  %v354 = vld [vmem:[%s5 + $0x50] sm:$0xf]
  %v355 = vld [vmem:[%s5 + $0x54] sm:$0xf]
  %v356 = vld [vmem:[%s5 + $0x58] sm:$0xf]
  %v357 = vld [vmem:[%s5 + $0x5c] sm:$0xf]
  %v358 = vld [vmem:[%s5 + $0x60] sm:$0xf]
  %v359 = vld [vmem:[%s5 + $0x64] sm:$0xf]
  %v360 = vld [vmem:[%s5 + $0x68] sm:$0xf]
  %v361 = vld [vmem:[%s5 + $0x6c] sm:$0xf]
  %v362 = vld [vmem:[%s5 + $0x70] sm:$0xf]
  %v363 = vld [vmem:[%s5 + $0x74] sm:$0xf]
  %v364 = vld [vmem:[%s5 + $0x78] sm:$0xf]
  %v365 = vld [vmem:[%s5 + $0x7c] sm:$0xf]
  %v366 = vld [vmem:[%s6] sm:$0x1]
  %v368 = vperm.slane %v366, 0
  %v402 = vunpack.c.l.b16 %v334
  %v403 = vunpack.c.l.b16 %v335
  %v404 = vunpack.c.l.b16 %v336
  %v405 = vunpack.c.l.b16 %v337
  %v406 = vunpack.c.l.b16 %v338
  %v407 = vunpack.c.l.b16 %v339
  %v408 = vunpack.c.l.b16 %v340
  %v409 = vunpack.c.l.b16 %v341
  %v410 = vunpack.c.l.b16 %v342
  %v411 = vunpack.c.l.b16 %v343
  %v412 = vunpack.c.l.b16 %v344
  %v413 = vunpack.c.l.b16 %v345
  %v414 = vunpack.c.l.b16 %v346
  %v415 = vunpack.c.l.b16 %v347
  %v416 = vunpack.c.l.b16 %v348
  %v417 = vunpack.c.l.b16 %v349
  %v418 = vunpack.c.l.b16 %v350
  %v419 = vunpack.c.l.b16 %v351
  %v420 = vunpack.c.l.b16 %v352
  %v421 = vunpack.c.l.b16 %v353
  %v422 = vunpack.c.l.b16 %v354
  %v423 = vunpack.c.l.b16 %v355
  %v424 = vunpack.c.l.b16 %v356
  %v425 = vunpack.c.l.b16 %v357
  %v426 = vunpack.c.l.b16 %v358
  %v427 = vunpack.c.l.b16 %v359
  %v428 = vunpack.c.l.b16 %v360
  %v429 = vunpack.c.l.b16 %v361
  %v430 = vunpack.c.l.b16 %v362
  %v431 = vunpack.c.l.b16 %v363
  %v432 = vunpack.c.l.b16 %v364
  %v433 = vunpack.c.l.b16 %v365
  %v434 = vpack.c.b16 %v403, %v402
  %v435 = vpack.c.b16 %v405, %v404
  %v436 = vpack.c.b16 %v407, %v406
  %v437 = vpack.c.b16 %v409, %v408
  %v438 = vpack.c.b16 %v411, %v410
  %v439 = vpack.c.b16 %v413, %v412
  %v440 = vpack.c.b16 %v415, %v414
  %v441 = vpack.c.b16 %v417, %v416
  %v442 = vpack.c.b16 %v419, %v418
  %v443 = vpack.c.b16 %v421, %v420
  %v444 = vpack.c.b16 %v423, %v422
  %v445 = vpack.c.b16 %v425, %v424
  %v446 = vpack.c.b16 %v427, %v426
  %v447 = vpack.c.b16 %v429, %v428
  %v448 = vpack.c.b16 %v431, %v430
  %v449 = vpack.c.b16 %v433, %v432
  %466 = vmatpush.bf16.msra.mxu0 %v441
  %467 = vmatpush.bf16.msra.mxu0 %v440
  %468 = vmatpush.bf16.msra.mxu0 %v439
  %469 = vmatpush.bf16.msra.mxu0 %v438
  %470 = vmatpush.bf16.msra.mxu0 %v437
  %471 = vmatpush.bf16.msra.mxu0 %v436
  %472 = vmatpush.bf16.msra.mxu0 %v435
  %473 = vmatpush.bf16.msra.mxu0 %v434
  %474 = vmatmul.bf16.gmra.mxu0 %v332
  %v475 = vpop.f32.mrf.mxu0
  %v476 = vadd.f32 %v368, %v475
  %v477 = vpop.f32.mrf.mxu0
  %478 = vdwg.mxu0
  %479 = vmatpush.bf16.msra.mxu0 %v449
  %480 = vmatpush.bf16.msra.mxu0 %v448
  %481 = vmatpush.bf16.msra.mxu0 %v447
  %482 = vmatpush.bf16.msra.mxu0 %v446
  %483 = vmatpush.bf16.msra.mxu0 %v445
  %484 = vmatpush.bf16.msra.mxu0 %v444
  %485 = vmatpush.bf16.msra.mxu0 %v443
  %486 = vmatpush.bf16.msra.mxu0 %v442
  %487 = vmatmul.bf16.gmra.mxu0 %v333
  %v488 = vpop.f32.mrf.mxu0
  %v489 = vadd.f32 %v476, %v488
  %v490 = vpop.f32.mrf.mxu0
  %491 = vdwg.mxu0
  %492 = vst [vmem:[%s7] sm:$0xff] %v489
  // Predicated region
  $region30: #{qnetwork_forward.1} parent=0 // pred_check
    _
  $region31: #{qnetwork_forward.1} parent=0 // pred_check_branch
    %494 = sbr.rel (0) target = $region33
  $region32: #{qnetwork_forward.1} parent=0 // pred_region
    _
  $region33: #{qnetwork_forward.1} parent=0 // pred_fallthru
    _
  // Predicated region
  $region34: #{qnetwork_forward.1} parent=0 // pred_check
    _
  $region35: #{qnetwork_forward.1} parent=0 // pred_check_branch
    %496 = sbr.rel (0) target = $region37
  $region36: #{qnetwork_forward.1} parent=0 // pred_region
    _
  $region37: #{qnetwork_forward.1} parent=0 // pred_fallthru
    _

</llo_original>
